<compile_context>
chip_gen: v6e
topology: v6e:2x2x1
jax: 0.10.0
libtpu: 0.0.40
codegen_flags: <defaults>
</compile_context>

<pallas_src>
import jax
import jax.numpy as jnp
from jax.experimental import pallas as pl
from jax.experimental.pallas import tpu as pltpu

STATE_DIM = 16        # state_shape: conv input width
POOL_OUT = 9          # floor((16 + 2*2 - 2 + 1)/2) == Linear(9, H) in-features
CONV_FEATS = 16       # POOL_OUT padded to 16 (zero-padded columns/rows, MXU friendly)
HIDDEN = 128          # hidden_sizes (PyTorch default)
OUT_DIM = 4           # output_dim
OUT_PAD = 8           # narrow, full-array output width (real logits in [0, OUT_DIM))
MAX_TILE_B = 4096     # batch tile upper bound (double-buffered footprint ~8 MiB)
SPLIT_MIN_TILE = 512  # only split into 2 grid steps if each tile keeps >= 512 rows


def _round_up(x, m):
    return ((x + m - 1) // m) * m


def mynet_kernel(x_ref, d0_ref, d1_ref, cb_ref, w1_ref, b1_ref,
                 w2_ref, b2_ref, w3_ref, b3_ref, out_ref):
    x = x_ref[...]                                    # (tile_b, 16) f32
    xm = x.astype(d0_ref.dtype)                       # no-op in f32 mode

    # Conv1d(k=2, pad=2) at even / odd output positions via constant shift matrices,
    # then MaxPool1d(2) + ReLU.  Columns 9..15 are zero (junk), killed by w1p below.
    y0 = jnp.dot(xm, d0_ref[...], preferred_element_type=jnp.float32)
    y1 = jnp.dot(xm, d1_ref[...], preferred_element_type=jnp.float32)
    h = jnp.maximum(jnp.maximum(y0, y1) + cb_ref[...], 0.0)          # (tile_b, 16)

    # MLP head on the MXU (f32 accumulation).
    h1 = jnp.maximum(
        jnp.dot(h.astype(w1_ref.dtype), w1_ref[...],
                preferred_element_type=jnp.float32) + b1_ref[...], 0.0)
    h2 = jnp.maximum(
        jnp.dot(h1.astype(w2_ref.dtype), w2_ref[...],
                preferred_element_type=jnp.float32) + b2_ref[...], 0.0)
    out_ref[...] = (jnp.dot(h2.astype(w3_ref.dtype), w3_ref[...],
                            preferred_element_type=jnp.float32)
                    + b3_ref[...]).astype(out_ref.dtype)


def prepare_params(params, use_bf16_matmul=False):
    """One-time parameter re-layout (off the per-call hot path).

    Conv (cross-correlation): y[i] = w0*x[i-2] + w1*x[i-1] + cb, i in [0, 19),
    with out-of-range x treated as 0 (padding=2).  Pool feature j = max(y[2j], y[2j+1]).
    D0 column j holds the x-coefficients of y[2j]; D1 column j those of y[2j+1].
    """
    w0 = params["conv_w"][0].astype(jnp.float32)
    w1c = params["conv_w"][1].astype(jnp.float32)

    d0 = jnp.zeros((STATE_DIM, CONV_FEATS), jnp.float32)
    d1 = jnp.zeros((STATE_DIM, CONV_FEATS), jnp.float32)
    for j in range(POOL_OUT):
        r = 2 * j - 2
        if 0 <= r < STATE_DIM:
            d0 = d0.at[r, j].set(w0)
        r = 2 * j - 1
        if 0 <= r < STATE_DIM:
            d0 = d0.at[r, j].set(w1c)
            d1 = d1.at[r, j].set(w0)
        r = 2 * j
        if 0 <= r < STATE_DIM:
            d1 = d1.at[r, j].set(w1c)

    cb = jnp.full((1, CONV_FEATS), params["conv_b"][0], jnp.float32)
    # Linear(9,H) weight padded with zero rows 9..15 (kills the junk feature lanes).
    w1p = jnp.zeros((CONV_FEATS, HIDDEN), jnp.float32).at[:POOL_OUT, :].set(params["w1"])
    # Last Linear padded to the narrow 8-lane output.
    w3p = jnp.zeros((HIDDEN, OUT_PAD), jnp.float32).at[:, :OUT_DIM].set(params["w3"])
    b3p = jnp.zeros((1, OUT_PAD), jnp.float32).at[:, :OUT_DIM].set(params["b3"])

    mm_dtype = jnp.bfloat16 if use_bf16_matmul else jnp.float32
    return {
        "d0": d0.astype(mm_dtype), "d1": d1.astype(mm_dtype), "cb": cb,
        "w1p": w1p.astype(mm_dtype), "b1": params["b1"].astype(jnp.float32),
        "w2": params["w2"].astype(mm_dtype), "b2": params["b2"].astype(jnp.float32),
        "w3p": w3p.astype(mm_dtype), "b3p": b3p,
    }


def mynet_forward(obs, prep, state=None):
    B = obs.shape[0]
    x = obs.reshape(B, -1).astype(jnp.float32)        # obs.view(batch, 1, -1), C==1 squeezed
    assert x.shape[1] == STATE_DIM

    # Batch tiling: big tiles (per-step overhead ~0.35us), but keep >= 2 grid steps
    # when the batch is large enough so both v7x TensorCores get work.
    rounded = _round_up(B, 8)
    n_steps = max(1, -(-rounded // MAX_TILE_B))
    if n_steps == 1 and rounded >= 2 * SPLIT_MIN_TILE:
        n_steps = 2
    tile_b = _round_up(-(-rounded // n_steps), 8)
    B_pad = _round_up(B, tile_b)
    if B_pad != B:
        x = jnp.pad(x, ((0, B_pad - B), (0, 0)))      # batch pad only (no lane pad pass)
    grid = (B_pad // tile_b,)

    const2d = lambda shape: pl.BlockSpec(shape, lambda i: (0, 0))   # VMEM-resident weights

    # VMEM budget: streamed blocks lane-pad to 128 in VMEM and are double-buffered.
    stream_bytes = 2 * (tile_b * 128 * 4) * 2                        # input + output
    weight_bytes = 2 * 4 * 128 * (16 + 16 + 8 + 16 + 8 + 128 + 8 + 128 + 8)
    vmem_limit = min(max(stream_bytes + weight_bytes + (4 << 20), 32 << 20), 48 << 20)

    flops = 2 * B_pad * (2 * STATE_DIM * CONV_FEATS + CONV_FEATS * HIDDEN
                         + HIDDEN * HIDDEN + HIDDEN * OUT_PAD)
    bytes_accessed = 4 * (B_pad * (STATE_DIM + OUT_PAD)
                          + 2 * STATE_DIM * CONV_FEATS + CONV_FEATS
                          + CONV_FEATS * HIDDEN + HIDDEN
                          + HIDDEN * HIDDEN + HIDDEN
                          + HIDDEN * OUT_PAD + OUT_PAD)

    out = pl.pallas_call(
        mynet_kernel,
        out_shape=jax.ShapeDtypeStruct((B_pad, OUT_PAD), jnp.float32),
        grid=grid,
        in_specs=[
            pl.BlockSpec((tile_b, STATE_DIM), lambda i: (i, 0)),     # batch-streamed input
            const2d((STATE_DIM, CONV_FEATS)),                        # d0
            const2d((STATE_DIM, CONV_FEATS)),                        # d1
            const2d((1, CONV_FEATS)),                                # conv bias (broadcast)
            const2d((CONV_FEATS, HIDDEN)), const2d((1, HIDDEN)),     # w1p, b1
            const2d((HIDDEN, HIDDEN)), const2d((1, HIDDEN)),         # w2,  b2
            const2d((HIDDEN, OUT_PAD)), const2d((1, OUT_PAD)),       # w3p, b3p
        ],
        out_specs=pl.BlockSpec((tile_b, OUT_PAD), lambda i: (i, 0)),
        compiler_params=pltpu.CompilerParams(
            dimension_semantics=("parallel",),
            vmem_limit_bytes=int(vmem_limit)),
        cost_estimate=pl.CostEstimate(flops=flops, transcendentals=0,
                                      bytes_accessed=bytes_accessed),
    )(x, prep["d0"], prep["d1"], prep["cb"], prep["w1p"], prep["b1"],
      prep["w2"], prep["b2"], prep["w3p"], prep["b3p"])

    return out[:B, :OUT_DIM], state


def make_params(key):
    ks = jax.random.split(key, 8)
    scale = 0.1
    return {
        "conv_w": jax.random.normal(ks[0], (2,), jnp.float32) * scale,
        "conv_b": jax.random.normal(ks[1], (1,), jnp.float32) * scale,
        "w1": jax.random.normal(ks[2], (POOL_OUT, HIDDEN), jnp.float32) * scale,
        "b1": jax.random.normal(ks[3], (1, HIDDEN), jnp.float32) * scale,
        "w2": jax.random.normal(ks[4], (HIDDEN, HIDDEN), jnp.float32) * scale,
        "b2": jax.random.normal(ks[5], (1, HIDDEN), jnp.float32) * scale,
        "w3": jax.random.normal(ks[6], (HIDDEN, OUT_DIM), jnp.float32) * scale,
        "b3": jax.random.normal(ks[7], (1, OUT_DIM), jnp.float32) * scale,
    }


def reference_forward(obs, params):
    # pure-jnp reference mirroring the PyTorch forward (full-precision matmuls)
    B = obs.shape[0]
    x = obs.reshape(B, -1).astype(jnp.float32)
    xp = jnp.pad(x, ((0, 0), (2, 2)))
    y = params["conv_w"][0] * xp[:, :-1] + params["conv_w"][1] * xp[:, 1:] + params["conv_b"][0]
    n = (y.shape[1] // 2) * 2
    z = jnp.max(y[:, :n].reshape(B, -1, 2), axis=-1)
    h = jax.nn.relu(z)
    hp = jax.lax.Precision.HIGHEST
    h1 = jax.nn.relu(jnp.dot(h, params["w1"], precision=hp) + params["b1"])
    h2 = jax.nn.relu(jnp.dot(h1, params["w2"], precision=hp) + params["b2"])
    return jnp.dot(h2, params["w3"], precision=hp) + params["b3"]


if __name__ == "__main__":
    key = jax.random.PRNGKey(0)
    k_obs, k_par = jax.random.split(key)
    obs = jax.random.normal(k_obs, (2, STATE_DIM), jnp.float32)   # batch=2, state_shape=16
    params = make_params(k_par)
    prep = prepare_params(params)                                 # f32 weights (exact numerics)

    logits, state = mynet_forward(obs, prep)
    logits = jax.block_until_ready(logits)

    ref = reference_forward(obs, params)
    assert logits.shape == (2, OUT_DIM)
    # Tolerance covers possible MXU f32-pass vs bf16-pass differences between the
    # Pallas dot and the XLA reference dot; structural errors would be O(0.1).
    assert jnp.allclose(logits, ref, atol=2e-3, rtol=2e-3), "mismatch vs reference"
    print("KERNEL_OK")
</pallas_src>

<mosaic_0001>
module attributes {stable_mosaic.version = 11 : i64} {
  func.func @mynet_kernel(%arg0: i32, %arg1: memref<8x16xf32, #tpu.memory_space<vmem>>, %arg2: memref<16x16xf32, #tpu.memory_space<vmem>>, %arg3: memref<16x16xf32, #tpu.memory_space<vmem>>, %arg4: memref<1x16xf32, #tpu.memory_space<vmem>>, %arg5: memref<16x128xf32, #tpu.memory_space<vmem>>, %arg6: memref<1x128xf32, #tpu.memory_space<vmem>>, %arg7: memref<128x128xf32, #tpu.memory_space<vmem>>, %arg8: memref<1x128xf32, #tpu.memory_space<vmem>>, %arg9: memref<128x8xf32, #tpu.memory_space<vmem>>, %arg10: memref<1x8xf32, #tpu.memory_space<vmem>>, %arg11: memref<8x8xf32, #tpu.memory_space<vmem>>) attributes {dimension_semantics = [#tpu.dimension_semantics<parallel>], iteration_bounds = array<i64: 1>, scalar_prefetch = 0 : i64, scratch_operands = 0 : i64, tpu.core_type = #tpu.core_type<tc>, window_params = [{transform_indices = @transform_0, window_bounds = array<i64: 8, 16>}, {pipeline_mode = #tpu.pipeline_mode<synchronous>, transform_indices = @transform_1, window_bounds = array<i64: 16, 16>}, {pipeline_mode = #tpu.pipeline_mode<synchronous>, transform_indices = @transform_2, window_bounds = array<i64: 16, 16>}, {pipeline_mode = #tpu.pipeline_mode<synchronous>, transform_indices = @transform_3, window_bounds = array<i64: 1, 16>}, {pipeline_mode = #tpu.pipeline_mode<synchronous>, transform_indices = @transform_4, window_bounds = array<i64: 16, 128>}, {pipeline_mode = #tpu.pipeline_mode<synchronous>, transform_indices = @transform_5, window_bounds = array<i64: 1, 128>}, {pipeline_mode = #tpu.pipeline_mode<synchronous>, transform_indices = @transform_6, window_bounds = array<i64: 128, 128>}, {pipeline_mode = #tpu.pipeline_mode<synchronous>, transform_indices = @transform_7, window_bounds = array<i64: 1, 128>}, {pipeline_mode = #tpu.pipeline_mode<synchronous>, transform_indices = @transform_8, window_bounds = array<i64: 128, 8>}, {pipeline_mode = #tpu.pipeline_mode<synchronous>, transform_indices = @transform_9, window_bounds = array<i64: 1, 8>}, {transform_indices = @transform_10, window_bounds = array<i64: 8, 8>}]} {
    %c0 = arith.constant 0 : index
    %c0_0 = arith.constant 0 : index
    %0 = vector.load %arg1[%c0, %c0_0] : memref<8x16xf32, #tpu.memory_space<vmem>>, vector<8x16xf32>
    %c0_1 = arith.constant 0 : index
    %c0_2 = arith.constant 0 : index
    %1 = vector.load %arg2[%c0_1, %c0_2] : memref<16x16xf32, #tpu.memory_space<vmem>>, vector<16x16xf32>
    %cst = arith.constant dense<0.000000e+00> : vector<8x16xf32>
    %2 = tpu.matmul %0, %1, %cst {dimension_numbers = #tpu.dot_dimension_numbers<[1], [0], [0], [1], [0, 0, 1, 1], [], []>} : vector<8x16xf32>, vector<16x16xf32>, vector<8x16xf32> -> vector<8x16xf32>
    %c0_3 = arith.constant 0 : index
    %c0_4 = arith.constant 0 : index
    %3 = vector.load %arg3[%c0_3, %c0_4] : memref<16x16xf32, #tpu.memory_space<vmem>>, vector<16x16xf32>
    %cst_5 = arith.constant dense<0.000000e+00> : vector<8x16xf32>
    %4 = tpu.matmul %0, %3, %cst_5 {dimension_numbers = #tpu.dot_dimension_numbers<[1], [0], [0], [1], [0, 0, 1, 1], [], []>} : vector<8x16xf32>, vector<16x16xf32>, vector<8x16xf32> -> vector<8x16xf32>
    %5 = arith.maximumf %2, %4 : vector<8x16xf32>
    %c0_6 = arith.constant 0 : index
    %c0_7 = arith.constant 0 : index
    %6 = vector.load %arg4[%c0_6, %c0_7] : memref<1x16xf32, #tpu.memory_space<vmem>>, vector<1x16xf32>
    %7 = vector.broadcast %6 : vector<1x16xf32> to vector<8x16xf32>
    %8 = arith.addf %5, %7 : vector<8x16xf32>
    %cst_8 = arith.constant 0.000000e+00 : f32
    %9 = vector.broadcast %cst_8 : f32 to vector<8x16xf32>
    %10 = arith.maximumf %8, %9 : vector<8x16xf32>
    %c0_9 = arith.constant 0 : index
    %c0_10 = arith.constant 0 : index
    %11 = vector.load %arg5[%c0_9, %c0_10] : memref<16x128xf32, #tpu.memory_space<vmem>>, vector<16x128xf32>
    %cst_11 = arith.constant dense<0.000000e+00> : vector<8x128xf32>
    %12 = tpu.matmul %10, %11, %cst_11 {dimension_numbers = #tpu.dot_dimension_numbers<[1], [0], [0], [1], [0, 0, 1, 1], [], []>} : vector<8x16xf32>, vector<16x128xf32>, vector<8x128xf32> -> vector<8x128xf32>
    %c0_12 = arith.constant 0 : index
    %c0_13 = arith.constant 0 : index
    %13 = vector.load %arg6[%c0_12, %c0_13] : memref<1x128xf32, #tpu.memory_space<vmem>>, vector<1x128xf32>
    %14 = vector.broadcast %13 : vector<1x128xf32> to vector<8x128xf32>
    %15 = arith.addf %12, %14 : vector<8x128xf32>
    %cst_14 = arith.constant 0.000000e+00 : f32
    %16 = vector.broadcast %cst_14 : f32 to vector<8x128xf32>
    %17 = arith.maximumf %15, %16 : vector<8x128xf32>
    %c0_15 = arith.constant 0 : index
    %c0_16 = arith.constant 0 : index
    %18 = vector.load %arg7[%c0_15, %c0_16] : memref<128x128xf32, #tpu.memory_space<vmem>>, vector<128x128xf32>
    %cst_17 = arith.constant dense<0.000000e+00> : vector<8x128xf32>
    %19 = tpu.matmul %17, %18, %cst_17 {dimension_numbers = #tpu.dot_dimension_numbers<[1], [0], [0], [1], [0, 0, 1, 1], [], []>} : vector<8x128xf32>, vector<128x128xf32>, vector<8x128xf32> -> vector<8x128xf32>
    %c0_18 = arith.constant 0 : index
    %c0_19 = arith.constant 0 : index
    %20 = vector.load %arg8[%c0_18, %c0_19] : memref<1x128xf32, #tpu.memory_space<vmem>>, vector<1x128xf32>
    %21 = vector.broadcast %20 : vector<1x128xf32> to vector<8x128xf32>
    %22 = arith.addf %19, %21 : vector<8x128xf32>
    %cst_20 = arith.constant 0.000000e+00 : f32
    %23 = vector.broadcast %cst_20 : f32 to vector<8x128xf32>
    %24 = arith.maximumf %22, %23 : vector<8x128xf32>
    %c0_21 = arith.constant 0 : index
    %c0_22 = arith.constant 0 : index
    %25 = vector.load %arg9[%c0_21, %c0_22] : memref<128x8xf32, #tpu.memory_space<vmem>>, vector<128x8xf32>
    %cst_23 = arith.constant dense<0.000000e+00> : vector<8x8xf32>
    %26 = tpu.matmul %24, %25, %cst_23 {dimension_numbers = #tpu.dot_dimension_numbers<[1], [0], [0], [1], [0, 0, 1, 1], [], []>} : vector<8x128xf32>, vector<128x8xf32>, vector<8x8xf32> -> vector<8x8xf32>
    %c0_24 = arith.constant 0 : index
    %c0_25 = arith.constant 0 : index
    %27 = vector.load %arg10[%c0_24, %c0_25] : memref<1x8xf32, #tpu.memory_space<vmem>>, vector<1x8xf32>
    %28 = vector.broadcast %27 : vector<1x8xf32> to vector<8x8xf32>
    %29 = arith.addf %26, %28 : vector<8x8xf32>
    %c0_26 = arith.constant 0 : index
    %c0_27 = arith.constant 0 : index
    %30 = vector.load %arg11[%c0_26, %c0_27] : memref<8x8xf32, #tpu.memory_space<vmem>>, vector<8x8xf32>
    tpu.vector_store %arg11[%c0_26, %c0_27], %29 {strides = array<i32>} : memref<8x8xf32, #tpu.memory_space<vmem>>, vector<8x8xf32>,
    return
  }
  func.func @transform_0(%arg0: i32) -> (i32, i32) {
    %c0_i32 = arith.constant 0 : i32
    %c0_i32_0 = arith.constant 0 : i32
    return %arg0, %c0_i32 : i32, i32
  }
  func.func @transform_1(%arg0: i32) -> (i32, i32) {
    %c0_i32 = arith.constant 0 : i32
    %c0_i32_0 = arith.constant 0 : i32
    %c0_i32_1 = arith.constant 0 : i32
    return %c0_i32, %c0_i32_0 : i32, i32
  }
  func.func @transform_2(%arg0: i32) -> (i32, i32) {
    %c0_i32 = arith.constant 0 : i32
    %c0_i32_0 = arith.constant 0 : i32
    %c0_i32_1 = arith.constant 0 : i32
    return %c0_i32, %c0_i32_0 : i32, i32
  }
  func.func @transform_3(%arg0: i32) -> (i32, i32) {
    %c0_i32 = arith.constant 0 : i32
    %c0_i32_0 = arith.constant 0 : i32
    %c0_i32_1 = arith.constant 0 : i32
    return %c0_i32, %c0_i32_0 : i32, i32
  }
  func.func @transform_4(%arg0: i32) -> (i32, i32) {
    %c0_i32 = arith.constant 0 : i32
    %c0_i32_0 = arith.constant 0 : i32
    %c0_i32_1 = arith.constant 0 : i32
    return %c0_i32, %c0_i32_0 : i32, i32
  }
  func.func @transform_5(%arg0: i32) -> (i32, i32) {
    %c0_i32 = arith.constant 0 : i32
    %c0_i32_0 = arith.constant 0 : i32
    %c0_i32_1 = arith.constant 0 : i32
    return %c0_i32, %c0_i32_0 : i32, i32
  }
  func.func @transform_6(%arg0: i32) -> (i32, i32) {
    %c0_i32 = arith.constant 0 : i32
    %c0_i32_0 = arith.constant 0 : i32
    %c0_i32_1 = arith.constant 0 : i32
    return %c0_i32, %c0_i32_0 : i32, i32
  }
  func.func @transform_7(%arg0: i32) -> (i32, i32) {
    %c0_i32 = arith.constant 0 : i32
    %c0_i32_0 = arith.constant 0 : i32
    %c0_i32_1 = arith.constant 0 : i32
    return %c0_i32, %c0_i32_0 : i32, i32
  }
  func.func @transform_8(%arg0: i32) -> (i32, i32) {
    %c0_i32 = arith.constant 0 : i32
    %c0_i32_0 = arith.constant 0 : i32
    %c0_i32_1 = arith.constant 0 : i32
    return %c0_i32, %c0_i32_0 : i32, i32
  }
  func.func @transform_9(%arg0: i32) -> (i32, i32) {
    %c0_i32 = arith.constant 0 : i32
    %c0_i32_0 = arith.constant 0 : i32
    %c0_i32_1 = arith.constant 0 : i32
    return %c0_i32, %c0_i32_0 : i32, i32
  }
  func.func @transform_10(%arg0: i32) -> (i32, i32) {
    %c0_i32 = arith.constant 0 : i32
    %c0_i32_0 = arith.constant 0 : i32
    return %arg0, %c0_i32 : i32, i32
  }
}

</mosaic_0001>

<llo_original>
// kernel: tpu_custom_call.1
$region0: #{tpu_custom_call.1}
  #allocation0 [shape = 'u32[]', space=smem, size = 0x4, offset = 0x4, fixed_abs, tag = 'smem constant byte address 0x4 - core index']
  #allocation1 [shape = 'u32[144,128]{1,0:T(1,128)}', space=vmem, size = 0x12000, scoped, tag = 'internal scratch']
  %s0 = inlined_call_operand.hbm [shape: f32[8,16], index: 0, kind: input, shape index: {}]
  %s1 = inlined_call_operand.vmem [shape: f32[16,16], index: 1, kind: input, shape index: {}]
  %s2 = inlined_call_operand.hbm [shape: f32[16,16], index: 2, kind: input, shape index: {}]
  %s3 = inlined_call_operand.vmem [shape: f32[1,16], index: 3, kind: input, shape index: {}]
  %s4 = inlined_call_operand.hbm [shape: f32[16,128], index: 4, kind: input, shape index: {}]
  %s5 = inlined_call_operand.vmem [shape: f32[1,128], index: 5, kind: input, shape index: {}]
  %s6 = inlined_call_operand.vmem [shape: f32[128,128], index: 6, kind: input, shape index: {}]
  %s7 = inlined_call_operand.vmem [shape: f32[1,128], index: 7, kind: input, shape index: {}]
  %s8 = inlined_call_operand.vmem [shape: f32[128,8], index: 8, kind: input, shape index: {}]
  %s9 = inlined_call_operand.vmem [shape: f32[1,8], index: 9, kind: input, shape index: {}]
  %s10 = inlined_call_operand.hbm [shape: f32[8,8], index: 10, kind: output, shape index: {}]
  %s11 = sld [smem:[#allocation0]]
  $region62: #{tpu_custom_call.1} parent=0
    _
  %s13 = ssub.s32 1, %s11
  %s14 = scalar_select 0, %s13, %s11
  $region1: #{tpu_custom_call.1} parent=0
    #allocation2 [shape = 'u8[4096]{0}', space=vmem, size = 0x1000, scoped, tag = 'input window, operand 0, single buffered']
    #allocation3 [shape = 's32[1]{0}', space=sflag, size = 0x4, scoped, tag = 'scoped memory for tpu_custom_call.1']
    #allocation4 [shape = 's32[1]{0}', space=sflag, size = 0x4, scoped, tag = 'scoped memory for tpu_custom_call.1']
    #allocation5 [shape = 'u8[8192]{0}', space=vmem, size = 0x2000, scoped, tag = 'input window, operand 2, single buffered']
    #allocation6 [shape = 's32[1]{0}', space=sflag, size = 0x4, scoped, tag = 'scoped memory for tpu_custom_call.1']
    #allocation7 [shape = 'u8[8192]{0}', space=vmem, size = 0x2000, scoped, tag = 'input window, operand 4, single buffered']
    #allocation8 [shape = 'u8[4096]{0}', space=vmem, size = 0x1000, scoped, tag = 'output window, operand 0, single buffered']
    %15 = vsyncpa [#allocation3], 0
    %16 = vsyncpa [#allocation6], 0
    %17 = vsyncpa [#allocation4], 0
    // Predicated region
    $region2: #{tpu_custom_call.1} parent=1 // pred_check
      _
    $region3: #{tpu_custom_call.1} parent=1 // pred_check_branch
      %19 = sbr.rel (0) target = $region5
    $region4: #{tpu_custom_call.1} parent=1 // pred_region
      %s21 = ssub.s32 128, 128
      %22 = vsyncadd [#allocation3], %s21
      %s24 = sshll.u32 [#allocation2], 4
      %s25 = int_to_ptr.vmem [resolvable:$true] %s24
      %27 = dma.hbm_to_vmem [thread:$0]  %s0, 128, %s25, [#allocation3]
    $region5: #{tpu_custom_call.1} parent=1 // pred_fallthru
      _
    // Predicated region
    $region6: #{tpu_custom_call.1} parent=1 // pred_check
      _
    $region7: #{tpu_custom_call.1} parent=1 // pred_check_branch
      %29 = sbr.rel (0) target = $region9
    $region8: #{tpu_custom_call.1} parent=1 // pred_region
      _
    $region9: #{tpu_custom_call.1} parent=1 // pred_fallthru
      _
    // Predicated region
    $region10: #{tpu_custom_call.1} parent=1 // pred_check
      _
    $region11: #{tpu_custom_call.1} parent=1 // pred_check_branch
      %31 = sbr.rel (0) target = $region13
    $region12: #{tpu_custom_call.1} parent=1 // pred_region
      %s33 = ssub.s32 256, 256
      %34 = vsyncadd [#allocation6], %s33
      %s35 = sshll.u32 [#allocation5], 4
      %s36 = int_to_ptr.vmem [resolvable:$true] %s35
      %41 = dma.hbm_to_vmem [thread:$0]  %s2, 256, %s36, [#allocation6], 128, 128, 8
    $region13: #{tpu_custom_call.1} parent=1 // pred_fallthru
      _
    // Predicated region
    $region14: #{tpu_custom_call.1} parent=1 // pred_check
      _
    $region15: #{tpu_custom_call.1} parent=1 // pred_check_branch
      %43 = sbr.rel (0) target = $region17
    $region16: #{tpu_custom_call.1} parent=1 // pred_region
      _
    $region17: #{tpu_custom_call.1} parent=1 // pred_fallthru
      _
    // Predicated region
    $region18: #{tpu_custom_call.1} parent=1 // pred_check
      _
    $region19: #{tpu_custom_call.1} parent=1 // pred_check_branch
      %45 = sbr.rel (0) target = $region21
    $region20: #{tpu_custom_call.1} parent=1 // pred_region
      %s47 = ssub.s32 256, 256
      %48 = vsyncadd [#allocation6], %s47
      %s49 = sshll.u32 [#allocation7], 4
      %s50 = int_to_ptr.vmem [resolvable:$true] %s49
      %55 = dma.hbm_to_vmem [thread:$0]  %s4, 256, %s50, [#allocation6], 128, 128, 8
    $region21: #{tpu_custom_call.1} parent=1 // pred_fallthru
      _
    // Predicated region
    $region22: #{tpu_custom_call.1} parent=1 // pred_check
      _
    $region23: #{tpu_custom_call.1} parent=1 // pred_check_branch
      %57 = sbr.rel (0) target = $region25
    $region24: #{tpu_custom_call.1} parent=1 // pred_region
      _
    $region25: #{tpu_custom_call.1} parent=1 // pred_fallthru
      _
    // Predicated region
    $region26: #{tpu_custom_call.1} parent=1 // pred_check
      _
    $region27: #{tpu_custom_call.1} parent=1 // pred_check_branch
      %59 = sbr.rel (0) target = $region29
    $region28: #{tpu_custom_call.1} parent=1 // pred_region
      _
    $region29: #{tpu_custom_call.1} parent=1 // pred_fallthru
      _
    // Predicated region
    $region30: #{tpu_custom_call.1} parent=1 // pred_check
      _
    $region31: #{tpu_custom_call.1} parent=1 // pred_check_branch
      %61 = sbr.rel (0) target = $region33
    $region32: #{tpu_custom_call.1} parent=1 // pred_region
      _
    $region33: #{tpu_custom_call.1} parent=1 // pred_fallthru
      _
    // Predicated region
    $region34: #{tpu_custom_call.1} parent=1 // pred_check
      _
    $region35: #{tpu_custom_call.1} parent=1 // pred_check_branch
      %63 = sbr.rel (0) target = $region37
    $region36: #{tpu_custom_call.1} parent=1 // pred_region
      _
    $region37: #{tpu_custom_call.1} parent=1 // pred_fallthru
      _
    // Predicated region
    $region38: #{tpu_custom_call.1} parent=1 // pred_check
      _
    $region39: #{tpu_custom_call.1} parent=1 // pred_check_branch
      %65 = sbr.rel (0) target = $region41
    $region40: #{tpu_custom_call.1} parent=1 // pred_region
      _
    $region41: #{tpu_custom_call.1} parent=1 // pred_fallthru
      _
    // Predicated region
    $region42: #{tpu_custom_call.1} parent=1 // pred_check
      _
    $region43: #{tpu_custom_call.1} parent=1 // pred_check_branch
      %67 = sbr.rel (0) target = $region45
    $region44: #{tpu_custom_call.1} parent=1 // pred_region
      %68 = dma.done [#allocation3], 128
    $region45: #{tpu_custom_call.1} parent=1 // pred_fallthru
      _
    // Predicated region
    $region46: #{tpu_custom_call.1} parent=1 // pred_check
      _
    $region47: #{tpu_custom_call.1} parent=1 // pred_check_branch
      %70 = sbr.rel (0) target = $region49
    $region48: #{tpu_custom_call.1} parent=1 // pred_region
      %71 = dma.done [#allocation6], 256
    $region49: #{tpu_custom_call.1} parent=1 // pred_fallthru
      _
    // Predicated region
    $region50: #{tpu_custom_call.1} parent=1 // pred_check
      _
    $region51: #{tpu_custom_call.1} parent=1 // pred_check_branch
      %73 = sbr.rel (0) target = $region53
    $region52: #{tpu_custom_call.1} parent=1 // pred_region
      %74 = dma.done [#allocation6], 256
    $region53: #{tpu_custom_call.1} parent=1 // pred_fallthru
      _
    %v75 = vld [vmem:[#allocation2] sm:$0xff]
    %v76 = vld [vmem:[%s1] sm:$0xff]
    %v77 = vld [vmem:[%s1 + $0x8] sm:$0xff]
    %vm78 = vcmask 130048
    %v80 = vsel %vm78, %v75, 0
    %82 = vmatprep.subr.mxu0 0.0
    %83 = vmatpush1.msra.mxu0 0.0
    %84 = vmatprep.subr.mxu0 0.0
    %85 = vmatpush1.msra.mxu0 0.0
    %86 = vmatprep.subr.mxu0 0.0
    %87 = vmatpush1.msra.mxu0 0.0
    %88 = vmatprep.subr.mxu0 0.0
    %89 = vmatpush1.msra.mxu0 0.0
    %90 = vmatprep.subr.mxu0 0.0
    %91 = vmatpush1.msra.mxu0 0.0
    %92 = vmatprep.subr.mxu0 0.0
    %93 = vmatpush1.msra.mxu0 0.0
    %94 = vmatprep.subr.mxu0 0.0
    %95 = vmatpush1.msra.mxu0 0.0
    %96 = vmatprep.subr.mxu0 0.0
    %97 = vmatpush1.msra.mxu0 0.0
    %98 = vmatprep.subr.mxu0 0.0
    %99 = vmatpush1.msra.mxu0 0.0
    %100 = vmatprep.subr.mxu0 0.0
    %101 = vmatpush1.msra.mxu0 0.0
    %102 = vmatprep.subr.mxu0 0.0
    %103 = vmatpush1.msra.mxu0 0.0
    %104 = vmatprep.subr.mxu0 0.0
    %105 = vmatpush1.msra.mxu0 0.0
    %106 = vmatprep.subr.mxu0 0.0
    %107 = vmatpush1.msra.mxu0 0.0
    %108 = vmatprep.subr.mxu0 0.0
    %109 = vmatpush1.msra.mxu0 0.0
    %110 = vmatprep.subr.mxu0 0.0
    %111 = vmatpush1.msra.mxu0 %v77
    %112 = vmatprep.subr.mxu0 0.0
    %113 = vmatpush1.msra.mxu0 %v76
    %114 = vmatprep.subr.mxu0 0.0
    %115 = vmatpush2.msra.mxu0 0.0
    %116 = vmatprep.subr.mxu0 0.0
    %117 = vmatpush2.msra.mxu0 0.0
    %118 = vmatprep.subr.mxu0 0.0
    %119 = vmatpush2.msra.mxu0 0.0
    %120 = vmatprep.subr.mxu0 0.0
    %121 = vmatpush2.msra.mxu0 0.0
    %122 = vmatprep.subr.mxu0 0.0
    %123 = vmatpush2.msra.mxu0 0.0
    %124 = vmatprep.subr.mxu0 0.0
    %125 = vmatpush2.msra.mxu0 0.0
    %126 = vmatprep.subr.mxu0 0.0
    %127 = vmatpush2.msra.mxu0 0.0
    %128 = vmatprep.subr.mxu0 0.0
    %129 = vmatpush2.msra.mxu0 0.0
    %130 = vmatprep.subr.mxu0 0.0
    %131 = vmatpush2.msra.mxu0 0.0
    %132 = vmatprep.subr.mxu0 0.0
    %133 = vmatpush2.msra.mxu0 0.0
    %134 = vmatprep.subr.mxu0 0.0
    %135 = vmatpush2.msra.mxu0 0.0
    %136 = vmatprep.subr.mxu0 0.0
    %137 = vmatpush2.msra.mxu0 0.0
    %138 = vmatprep.subr.mxu0 0.0
    %139 = vmatpush2.msra.mxu0 0.0
    %140 = vmatprep.subr.mxu0 0.0
    %141 = vmatpush2.msra.mxu0 0.0
    %142 = vmatprep.subr.mxu0 0.0
    %143 = vmatpush2.msra.mxu0 0.0
    %144 = vmatprep.subr.mxu0 0.0
    %145 = vmatpush2.msra.mxu0 0.0
    %146 = vmatprep.mubr.f32.mxu0 0.0
    %147 = vmatmul.mubr.f32.gmra.mxu0 %v80
    %v148 = vpop.f32.mrf.mxu0
    %v149 = vadd.f32 0.0, %v148
    %v150 = vpop.f32.mrf.mxu0
    %151 = vdwg.mxu0
    %v152 = vld [vmem:[#allocation5] sm:$0xff]
    %v153 = vld [vmem:[#allocation5 + $0x8] sm:$0xff]
    %154 = vmatprep.subr.mxu0 0.0
    %155 = vmatpush1.msra.mxu0 0.0
    %156 = vmatprep.subr.mxu0 0.0
    %157 = vmatpush1.msra.mxu0 0.0
    %158 = vmatprep.subr.mxu0 0.0
    %159 = vmatpush1.msra.mxu0 0.0
    %160 = vmatprep.subr.mxu0 0.0
    %161 = vmatpush1.msra.mxu0 0.0
    %162 = vmatprep.subr.mxu0 0.0
    %163 = vmatpush1.msra.mxu0 0.0
    %164 = vmatprep.subr.mxu0 0.0
    %165 = vmatpush1.msra.mxu0 0.0
    %166 = vmatprep.subr.mxu0 0.0
    %167 = vmatpush1.msra.mxu0 0.0
    %168 = vmatprep.subr.mxu0 0.0
    %169 = vmatpush1.msra.mxu0 0.0
    %170 = vmatprep.subr.mxu0 0.0
    %171 = vmatpush1.msra.mxu0 0.0
    %172 = vmatprep.subr.mxu0 0.0
    %173 = vmatpush1.msra.mxu0 0.0
    %174 = vmatprep.subr.mxu0 0.0
    %175 = vmatpush1.msra.mxu0 0.0
    %176 = vmatprep.subr.mxu0 0.0
    %177 = vmatpush1.msra.mxu0 0.0
    %178 = vmatprep.subr.mxu0 0.0
    %179 = vmatpush1.msra.mxu0 0.0
    %180 = vmatprep.subr.mxu0 0.0
    %181 = vmatpush1.msra.mxu0 0.0
    %182 = vmatprep.subr.mxu0 0.0
    %183 = vmatpush1.msra.mxu0 %v153
    %184 = vmatprep.subr.mxu0 0.0
    %185 = vmatpush1.msra.mxu0 %v152
    %186 = vmatprep.subr.mxu0 0.0
    %187 = vmatpush2.msra.mxu0 0.0
    %188 = vmatprep.subr.mxu0 0.0
    %189 = vmatpush2.msra.mxu0 0.0
    %190 = vmatprep.subr.mxu0 0.0
    %191 = vmatpush2.msra.mxu0 0.0
    %192 = vmatprep.subr.mxu0 0.0
    %193 = vmatpush2.msra.mxu0 0.0
    %194 = vmatprep.subr.mxu0 0.0
    %195 = vmatpush2.msra.mxu0 0.0
    %196 = vmatprep.subr.mxu0 0.0
    %197 = vmatpush2.msra.mxu0 0.0
    %198 = vmatprep.subr.mxu0 0.0
    %199 = vmatpush2.msra.mxu0 0.0
    %200 = vmatprep.subr.mxu0 0.0
    %201 = vmatpush2.msra.mxu0 0.0
    %202 = vmatprep.subr.mxu0 0.0
    %203 = vmatpush2.msra.mxu0 0.0
    %204 = vmatprep.subr.mxu0 0.0
    %205 = vmatpush2.msra.mxu0 0.0
    %206 = vmatprep.subr.mxu0 0.0
    %207 = vmatpush2.msra.mxu0 0.0
    %208 = vmatprep.subr.mxu0 0.0
    %209 = vmatpush2.msra.mxu0 0.0
    %210 = vmatprep.subr.mxu0 0.0
    %211 = vmatpush2.msra.mxu0 0.0
    %212 = vmatprep.subr.mxu0 0.0
    %213 = vmatpush2.msra.mxu0 0.0
    %214 = vmatprep.subr.mxu0 0.0
    %215 = vmatpush2.msra.mxu0 0.0
    %216 = vmatprep.subr.mxu0 0.0
    %217 = vmatpush2.msra.mxu0 0.0
    %218 = vmatprep.mubr.f32.mxu0 0.0
    %219 = vmatmul.mubr.f32.gmra.mxu0 %v80
    %v220 = vpop.f32.mrf.mxu0
    %v221 = vadd.f32 0.0, %v220
    %v222 = vpop.f32.mrf.mxu0
    %223 = vdwg.mxu0
    %v224 = vmax.f32 %v149, %v221
    %v225 = vld [vmem:[%s3] sm:$0x1]
    %v227 = vlaneseq
    %v228 = vshrl.u32 %v227, 7
    %v229 = vsub.s32 0, %v228
    %v230 = vrot.slane %v225, %v229
    %v232 = vadd.f32 %v224, %v230
    %v233 = vmax.f32 %v232, 0.0
    %v234 = vld [vmem:[#allocation7] sm:$0xff]
    %v235 = vld [vmem:[#allocation7 + $0x8] sm:$0xff]
    %v236 = vld [vmem:[%s5] sm:$0x1]
    %v238 = vlaneseq
    %v239 = vshrl.u32 %v238, 7
    %v240 = vsub.s32 0, %v239
    %v241 = vrot.slane %v236, %v240
    %v244 = vsel %vm78, %v233, 0
    %246 = vmatprep.subr.mxu0 0.0
    %247 = vmatpush1.msra.mxu0 0.0
    %248 = vmatprep.subr.mxu0 0.0
    %249 = vmatpush1.msra.mxu0 0.0
    %250 = vmatprep.subr.mxu0 0.0
    %251 = vmatpush1.msra.mxu0 0.0
    %252 = vmatprep.subr.mxu0 0.0
    %253 = vmatpush1.msra.mxu0 0.0
    %254 = vmatprep.subr.mxu0 0.0
    %255 = vmatpush1.msra.mxu0 0.0
    %256 = vmatprep.subr.mxu0 0.0
    %257 = vmatpush1.msra.mxu0 0.0
    %258 = vmatprep.subr.mxu0 0.0
    %259 = vmatpush1.msra.mxu0 0.0
    %260 = vmatprep.subr.mxu0 0.0
    %261 = vmatpush1.msra.mxu0 0.0
    %262 = vmatprep.subr.mxu0 0.0
    %263 = vmatpush1.msra.mxu0 0.0
    %264 = vmatprep.subr.mxu0 0.0
    %265 = vmatpush1.msra.mxu0 0.0
    %266 = vmatprep.subr.mxu0 0.0
    %267 = vmatpush1.msra.mxu0 0.0
    %268 = vmatprep.subr.mxu0 0.0
    %269 = vmatpush1.msra.mxu0 0.0
    %270 = vmatprep.subr.mxu0 0.0
    %271 = vmatpush1.msra.mxu0 0.0
    %272 = vmatprep.subr.mxu0 0.0
    %273 = vmatpush1.msra.mxu0 0.0
    %274 = vmatprep.subr.mxu0 0.0
    %275 = vmatpush1.msra.mxu0 %v235
    %276 = vmatprep.subr.mxu0 0.0
    %277 = vmatpush1.msra.mxu0 %v234
    %278 = vmatprep.subr.mxu0 0.0
    %279 = vmatpush2.msra.mxu0 0.0
    %280 = vmatprep.subr.mxu0 0.0
    %281 = vmatpush2.msra.mxu0 0.0
    %282 = vmatprep.subr.mxu0 0.0
    %283 = vmatpush2.msra.mxu0 0.0
    %284 = vmatprep.subr.mxu0 0.0
    %285 = vmatpush2.msra.mxu0 0.0
    %286 = vmatprep.subr.mxu0 0.0
    %287 = vmatpush2.msra.mxu0 0.0
    %288 = vmatprep.subr.mxu0 0.0
    %289 = vmatpush2.msra.mxu0 0.0
    %290 = vmatprep.subr.mxu0 0.0
    %291 = vmatpush2.msra.mxu0 0.0
    %292 = vmatprep.subr.mxu0 0.0
    %293 = vmatpush2.msra.mxu0 0.0
    %294 = vmatprep.subr.mxu0 0.0
    %295 = vmatpush2.msra.mxu0 0.0
    %296 = vmatprep.subr.mxu0 0.0
    %297 = vmatpush2.msra.mxu0 0.0
    %298 = vmatprep.subr.mxu0 0.0
    %299 = vmatpush2.msra.mxu0 0.0
    %300 = vmatprep.subr.mxu0 0.0
    %301 = vmatpush2.msra.mxu0 0.0
    %302 = vmatprep.subr.mxu0 0.0
    %303 = vmatpush2.msra.mxu0 0.0
    %304 = vmatprep.subr.mxu0 0.0
    %305 = vmatpush2.msra.mxu0 0.0
    %306 = vmatprep.subr.mxu0 0.0
    %307 = vmatpush2.msra.mxu0 0.0
    %308 = vmatprep.subr.mxu0 0.0
    %309 = vmatpush2.msra.mxu0 0.0
    %310 = vmatprep.mubr.f32.mxu0 0.0
    %311 = vmatmul.mubr.f32.gmra.mxu0 %v244
    %v312 = vpop.f32.mrf.mxu0
    %v313 = vadd.f32 %v241, %v312
    %v314 = vpop.f32.mrf.mxu0
    %315 = vdwg.mxu0
    %v316 = vmax.f32 %v313, 0.0
    %v317 = vld [vmem:[%s6] sm:$0xff]
    %v318 = vld [vmem:[%s6 + $0x8] sm:$0xff]
    %v319 = vld [vmem:[%s6 + $0x10] sm:$0xff]
    %v320 = vld [vmem:[%s6 + $0x18] sm:$0xff]
    %v321 = vld [vmem:[%s6 + $0x20] sm:$0xff]
    %v322 = vld [vmem:[%s6 + $0x28] sm:$0xff]
    %v323 = vld [vmem:[%s6 + $0x30] sm:$0xff]
    %v324 = vld [vmem:[%s6 + $0x38] sm:$0xff]
    %v325 = vld [vmem:[%s6 + $0x40] sm:$0xff]
    %v326 = vld [vmem:[%s6 + $0x48] sm:$0xff]
    %v327 = vld [vmem:[%s6 + $0x50] sm:$0xff]
    %v328 = vld [vmem:[%s6 + $0x58] sm:$0xff]
    %v329 = vld [vmem:[%s6 + $0x60] sm:$0xff]
    %v330 = vld [vmem:[%s6 + $0x68] sm:$0xff]
    %v331 = vld [vmem:[%s6 + $0x70] sm:$0xff]
    %v332 = vld [vmem:[%s6 + $0x78] sm:$0xff]
    %v333 = vld [vmem:[%s7] sm:$0x1]
    %v335 = vlaneseq
    %v336 = vshrl.u32 %v335, 7
    %v337 = vsub.s32 0, %v336
    %v338 = vrot.slane %v333, %v337
    %340 = vmatprep.subr.mxu0 0.0
    %341 = vmatpush1.msra.mxu0 %v332
    %342 = vmatprep.subr.mxu0 0.0
    %343 = vmatpush1.msra.mxu0 %v331
    %344 = vmatprep.subr.mxu0 0.0
    %345 = vmatpush1.msra.mxu0 %v330
    %346 = vmatprep.subr.mxu0 0.0
    %347 = vmatpush1.msra.mxu0 %v329
    %348 = vmatprep.subr.mxu0 0.0
    %349 = vmatpush1.msra.mxu0 %v328
    %350 = vmatprep.subr.mxu0 0.0
    %351 = vmatpush1.msra.mxu0 %v327
    %352 = vmatprep.subr.mxu0 0.0
    %353 = vmatpush1.msra.mxu0 %v326
    %354 = vmatprep.subr.mxu0 0.0
    %355 = vmatpush1.msra.mxu0 %v325
    %356 = vmatprep.subr.mxu0 0.0
    %357 = vmatpush1.msra.mxu0 %v324
    %358 = vmatprep.subr.mxu0 0.0
    %359 = vmatpush1.msra.mxu0 %v323
    %360 = vmatprep.subr.mxu0 0.0
    %361 = vmatpush1.msra.mxu0 %v322
    %362 = vmatprep.subr.mxu0 0.0
    %363 = vmatpush1.msra.mxu0 %v321
    %364 = vmatprep.subr.mxu0 0.0
    %365 = vmatpush1.msra.mxu0 %v320
    %366 = vmatprep.subr.mxu0 0.0
    %367 = vmatpush1.msra.mxu0 %v319
    %368 = vmatprep.subr.mxu0 0.0
    %369 = vmatpush1.msra.mxu0 %v318
    %370 = vmatprep.subr.mxu0 0.0
    %371 = vmatpush1.msra.mxu0 %v317
    %372 = vmatprep.subr.mxu0 0.0
    %373 = vmatpush2.msra.mxu0 0.0
    %374 = vmatprep.subr.mxu0 0.0
    %375 = vmatpush2.msra.mxu0 0.0
    %376 = vmatprep.subr.mxu0 0.0
    %377 = vmatpush2.msra.mxu0 0.0
    %378 = vmatprep.subr.mxu0 0.0
    %379 = vmatpush2.msra.mxu0 0.0
    %380 = vmatprep.subr.mxu0 0.0
    %381 = vmatpush2.msra.mxu0 0.0
    %382 = vmatprep.subr.mxu0 0.0
    %383 = vmatpush2.msra.mxu0 0.0
    %384 = vmatprep.subr.mxu0 0.0
    %385 = vmatpush2.msra.mxu0 0.0
    %386 = vmatprep.subr.mxu0 0.0
    %387 = vmatpush2.msra.mxu0 0.0
    %388 = vmatprep.subr.mxu0 0.0
    %389 = vmatpush2.msra.mxu0 0.0
    %390 = vmatprep.subr.mxu0 0.0
    %391 = vmatpush2.msra.mxu0 0.0
    %392 = vmatprep.subr.mxu0 0.0
    %393 = vmatpush2.msra.mxu0 0.0
    %394 = vmatprep.subr.mxu0 0.0
    %395 = vmatpush2.msra.mxu0 0.0
    %396 = vmatprep.subr.mxu0 0.0
    %397 = vmatpush2.msra.mxu0 0.0
    %398 = vmatprep.subr.mxu0 0.0
    %399 = vmatpush2.msra.mxu0 0.0
    %400 = vmatprep.subr.mxu0 0.0
    %401 = vmatpush2.msra.mxu0 0.0
    %402 = vmatprep.subr.mxu0 0.0
    %403 = vmatpush2.msra.mxu0 0.0
    %404 = vmatprep.mubr.f32.mxu0 0.0
    %405 = vmatmul.mubr.f32.gmra.mxu0 %v316
    %v406 = vpop.f32.mrf.mxu0
    %v407 = vadd.f32 %v338, %v406
    %v408 = vpop.f32.mrf.mxu0
    %409 = vdwg.mxu0
    %v410 = vmax.f32 %v407, 0.0
    %v411 = vld [vmem:[%s8] sm:$0xff]
    %v412 = vld [vmem:[%s8 + $0x8] sm:$0xff]
    %v413 = vld [vmem:[%s8 + $0x10] sm:$0xff]
    %v414 = vld [vmem:[%s8 + $0x18] sm:$0xff]
    %v415 = vld [vmem:[%s8 + $0x20] sm:$0xff]
    %v416 = vld [vmem:[%s8 + $0x28] sm:$0xff]
    %v417 = vld [vmem:[%s8 + $0x30] sm:$0xff]
    %v418 = vld [vmem:[%s8 + $0x38] sm:$0xff]
    %v419 = vld [vmem:[%s8 + $0x40] sm:$0xff]
    %v420 = vld [vmem:[%s8 + $0x48] sm:$0xff]
    %v421 = vld [vmem:[%s8 + $0x50] sm:$0xff]
    %v422 = vld [vmem:[%s8 + $0x58] sm:$0xff]
    %v423 = vld [vmem:[%s8 + $0x60] sm:$0xff]
    %v424 = vld [vmem:[%s8 + $0x68] sm:$0xff]
    %v425 = vld [vmem:[%s8 + $0x70] sm:$0xff]
    %v426 = vld [vmem:[%s8 + $0x78] sm:$0xff]
    %v427 = vld [vmem:[%s9] sm:$0x1]
    %v429 = vlaneseq
    %v430 = vshrl.u32 %v429, 7
    %v431 = vsub.s32 0, %v430
    %v432 = vrot.slane %v427, %v431
    %434 = vmatprep.subr.mxu0 0.0
    %435 = vmatpush1.msra.mxu0 %v426
    %436 = vmatprep.subr.mxu0 0.0
    %437 = vmatpush1.msra.mxu0 %v425
    %438 = vmatprep.subr.mxu0 0.0
    %439 = vmatpush1.msra.mxu0 %v424
    %440 = vmatprep.subr.mxu0 0.0
    %441 = vmatpush1.msra.mxu0 %v423
    %442 = vmatprep.subr.mxu0 0.0
    %443 = vmatpush1.msra.mxu0 %v422
    %444 = vmatprep.subr.mxu0 0.0
    %445 = vmatpush1.msra.mxu0 %v421
    %446 = vmatprep.subr.mxu0 0.0
    %447 = vmatpush1.msra.mxu0 %v420
    %448 = vmatprep.subr.mxu0 0.0
    %449 = vmatpush1.msra.mxu0 %v419
    %450 = vmatprep.subr.mxu0 0.0
    %451 = vmatpush1.msra.mxu0 %v418
    %452 = vmatprep.subr.mxu0 0.0
    %453 = vmatpush1.msra.mxu0 %v417
    %454 = vmatprep.subr.mxu0 0.0
    %455 = vmatpush1.msra.mxu0 %v416
    %456 = vmatprep.subr.mxu0 0.0
    %457 = vmatpush1.msra.mxu0 %v415
    %458 = vmatprep.subr.mxu0 0.0
    %459 = vmatpush1.msra.mxu0 %v414
    %460 = vmatprep.subr.mxu0 0.0
    %461 = vmatpush1.msra.mxu0 %v413
    %462 = vmatprep.subr.mxu0 0.0
    %463 = vmatpush1.msra.mxu0 %v412
    %464 = vmatprep.subr.mxu0 0.0
    %465 = vmatpush1.msra.mxu0 %v411
    %466 = vmatprep.subr.mxu0 0.0
    %467 = vmatpush2.msra.mxu0 0.0
    %468 = vmatprep.subr.mxu0 0.0
    %469 = vmatpush2.msra.mxu0 0.0
    %470 = vmatprep.subr.mxu0 0.0
    %471 = vmatpush2.msra.mxu0 0.0
    %472 = vmatprep.subr.mxu0 0.0
    %473 = vmatpush2.msra.mxu0 0.0
    %474 = vmatprep.subr.mxu0 0.0
    %475 = vmatpush2.msra.mxu0 0.0
    %476 = vmatprep.subr.mxu0 0.0
    %477 = vmatpush2.msra.mxu0 0.0
    %478 = vmatprep.subr.mxu0 0.0
    %479 = vmatpush2.msra.mxu0 0.0
    %480 = vmatprep.subr.mxu0 0.0
    %481 = vmatpush2.msra.mxu0 0.0
    %482 = vmatprep.subr.mxu0 0.0
    %483 = vmatpush2.msra.mxu0 0.0
    %484 = vmatprep.subr.mxu0 0.0
    %485 = vmatpush2.msra.mxu0 0.0
    %486 = vmatprep.subr.mxu0 0.0
    %487 = vmatpush2.msra.mxu0 0.0
    %488 = vmatprep.subr.mxu0 0.0
    %489 = vmatpush2.msra.mxu0 0.0
    %490 = vmatprep.subr.mxu0 0.0
    %491 = vmatpush2.msra.mxu0 0.0
    %492 = vmatprep.subr.mxu0 0.0
    %493 = vmatpush2.msra.mxu0 0.0
    %494 = vmatprep.subr.mxu0 0.0
    %495 = vmatpush2.msra.mxu0 0.0
    %496 = vmatprep.subr.mxu0 0.0
    %497 = vmatpush2.msra.mxu0 0.0
    %498 = vmatprep.mubr.f32.mxu0 0.0
    %499 = vmatmul.mubr.f32.gmra.mxu0 %v410
    %v500 = vpop.f32.mrf.mxu0
    %v501 = vadd.f32 %v432, %v500
    %v502 = vpop.f32.mrf.mxu0
    %503 = vdwg.mxu0
    %vm504 = vcmask 64512
    %505 = vst.msk [vmem:[#allocation8] sm:$0xff] %vm504, %v501
    // Predicated region
    $region54: #{tpu_custom_call.1} parent=1 // pred_check
      _
    $region55: #{tpu_custom_call.1} parent=1 // pred_check_branch
      %507 = sbr.rel (0) target = $region57
    $region56: #{tpu_custom_call.1} parent=1 // pred_region
      %s509 = ssub.s32 128, 128
      %510 = vsyncadd [#allocation4], %s509
      %s512 = sshll.u32 [#allocation8], 4
      %s513 = int_to_ptr.vmem [resolvable:$true] %s512
      %515 = dma.vmem_to_hbm [thread:$0]  %s513, 128, %s10, [#allocation4]
    $region57: #{tpu_custom_call.1} parent=1 // pred_fallthru
      _
    // Predicated region
    $region58: #{tpu_custom_call.1} parent=1 // pred_check
      _
    $region59: #{tpu_custom_call.1} parent=1 // pred_check_branch
      %517 = sbr.rel (0) target = $region61
    $region60: #{tpu_custom_call.1} parent=1 // pred_region
      %518 = dma.done [#allocation4], 128
    $region61: #{tpu_custom_call.1} parent=1 // pred_fallthru
      _
    %519 = vsyncpa [#allocation3], 1
    %520 = vsyncpa [#allocation6], 1
    %521 = vsyncpa [#allocation4], 1

</llo_original>
